<compile_context>
chip_gen: v7x
topology: tpu7x:2x2x1
jax: 0.10.0
libtpu: 0.0.40
codegen_flags: <defaults>
</compile_context>

<pallas_src>
import jax
import jax.numpy as jnp
from jax.experimental import pallas as pl
from jax.experimental.pallas import tpu as pltpu


def _laplacian_kernel(x_ref, o_ref):
    """x_ref/o_ref: (TB, S, F) block of TB independent (S, F) planes."""
    # Stream in the input dtype; widen in-register only (no-op for f32 input).
    x = x_ref[...].astype(jnp.float32)
    TB, S, F = x.shape

    # Separable stencil: [[1,-2,1],[-2,4,-2],[1,-2,1]] = outer([1,-2,1],[1,-2,1]).
    # 3-tap second difference along F (lane axis), zero boundary:
    #   t[b,s,f] = x[b,s,f-1] - 2*x[b,s,f] + x[b,s,f+1]
    zcol = jnp.zeros((TB, S, 1), jnp.float32)
    xf = jnp.concatenate([zcol, x, zcol], axis=2)          # (TB, S, F+2), VMEM only
    t = xf[:, :, 0:F] + xf[:, :, 2:F + 2] - 2.0 * x        # (TB, S, F)

    # 3-tap second difference along S (sublane axis), zero boundary:
    #   y[b,s,f] = t[b,s-1,f] - 2*t[b,s,f] + t[b,s+1,f]
    zrow = jnp.zeros((TB, 1, F), jnp.float32)
    ts = jnp.concatenate([zrow, t, zrow], axis=1)          # (TB, S+2, F), VMEM only
    y = ts[:, 0:S, :] + ts[:, 2:S + 2, :] - 2.0 * t        # (TB, S, F)

    # Conv2d bias is zeroed and frozen in the PyTorch module -> nothing to add.
    o_ref[...] = y.astype(o_ref.dtype)


def _choose_batch_tile(B, S, F, itemsize):
    """Pick TB = batch planes per grid step.

    Targets ~2 MiB per input block (amortizes per-step overhead; with
    double-buffered in+out blocks plus ~5 block-sized temporaries this stays
    under the raised VMEM limit on v5e/v6e/v7x), capped at ceil(B/2) so there
    are always >= 2 grid steps for the two v7x TensorCores when B >= 2.
    """
    target_bytes = 2 * 1024 * 1024
    plane_bytes = max(1, S * F * itemsize)
    tb = max(1, min(B, target_bytes // plane_bytes))
    if B >= 2:
        tb = min(tb, pl.cdiv(B, 2))
    # Prefer a TB dividing B (uniform, fully contiguous DMAs); accept a ragged
    # last block otherwise (batch planes are independent, so Pallas' masked
    # edge handling keeps it correct).
    for cand in range(tb, 0, -1):
        if B % cand == 0:
            if 2 * cand >= tb:
                return cand
            break
    return tb


def laplacian_stock_layer(x):
    """x: (B, S, F) -> (B, S, F); matches LaplacianStockLayer.forward."""
    B, S, F = x.shape
    tb = _choose_batch_tile(B, S, F, jnp.dtype(x.dtype).itemsize)
    grid = (pl.cdiv(B, tb),)
    return pl.pallas_call(
        _laplacian_kernel,
        out_shape=jax.ShapeDtypeStruct((B, S, F), x.dtype),
        grid_spec=pltpu.PrefetchScalarGridSpec(
            num_scalar_prefetch=0,
            grid=grid,
            in_specs=[pl.BlockSpec((tb, S, F), lambda b: (b, 0, 0))],
            out_specs=pl.BlockSpec((tb, S, F), lambda b: (b, 0, 0)),
        ),
        compiler_params=pltpu.CompilerParams(
            dimension_semantics=("parallel",),     # batch chunks are independent
            vmem_limit_bytes=48 * 1024 * 1024,     # block + temporaries headroom
        ),
    )(x)


def _reference(x):
    """Pure-JAX 9-tap reference of the same conv (correctness check)."""
    w = jnp.array([[1.0, -2.0, 1.0], [-2.0, 4.0, -2.0], [1.0, -2.0, 1.0]],
                  dtype=jnp.float32)
    B, S, F = x.shape
    xp = jnp.pad(x.astype(jnp.float32), ((0, 0), (1, 1), (1, 1)))
    out = jnp.zeros((B, S, F), jnp.float32)
    for di in range(3):
        for dj in range(3):
            out = out + w[di, dj] * xp[:, di:di + S, dj:dj + F]
    return out.astype(x.dtype)


if __name__ == "__main__":
    key = jax.random.PRNGKey(0)
    k1, k2 = jax.random.split(key)

    # Shapes implied by the module: (batch, seq_len, n_features), input_dim=16.
    B, S, F = 2, 8, 16
    x = jax.random.normal(k1, (B, S, F), dtype=jnp.float32)
    y = jax.block_until_ready(laplacian_stock_layer(x))
    assert y.shape == (B, S, F), f"Output shape {y.shape} != {(B, S, F)}"
    assert jnp.allclose(y, _reference(x), atol=1e-4, rtol=1e-5), "Mismatch vs reference"

    # Second case exercises multi-batch blocks (TB=2 planes per grid step).
    B2, S2, F2 = 4, 8, 16
    x2 = jax.random.normal(k2, (B2, S2, F2), dtype=jnp.float32)
    y2 = jax.block_until_ready(laplacian_stock_layer(x2))
    assert y2.shape == (B2, S2, F2), f"Output shape {y2.shape} != {(B2, S2, F2)}"
    assert jnp.allclose(y2, _reference(x2), atol=1e-4, rtol=1e-5), \
        "Mismatch vs reference (multi-batch block)"

    print("KERNEL_OK")
</pallas_src>

<mosaic_0001>
module attributes {stable_mosaic.version = 11 : i64} {
  func.func @_laplacian_kernel(%arg0: i32, %arg1: memref<1x8x16xf32, #tpu.memory_space<vmem>>, %arg2: memref<1x8x16xf32, #tpu.memory_space<vmem>>) attributes {dimension_semantics = [#tpu.dimension_semantics<parallel>], iteration_bounds = array<i64: 2>, scalar_prefetch = 0 : i64, scratch_operands = 0 : i64, tpu.core_type = #tpu.core_type<tc>, window_params = [{transform_indices = @transform_0, window_bounds = array<i64: 1, 8, 16>}, {transform_indices = @transform_1, window_bounds = array<i64: 1, 8, 16>}]} {
    %c0 = arith.constant 0 : index
    %c0_0 = arith.constant 0 : index
    %c0_1 = arith.constant 0 : index
    %0 = vector.load %arg1[%c0, %c0_0, %c0_1] : memref<1x8x16xf32, #tpu.memory_space<vmem>>, vector<1x8x16xf32>
    %cst = arith.constant 0.000000e+00 : f32
    %1 = vector.broadcast %cst : f32 to vector<1x8x1xf32>
    %2 = tpu.concatenate %1, %0, %1 in 2 : vector<1x8x1xf32>, vector<1x8x16xf32>, vector<1x8x1xf32> -> vector<1x8x18xf32>
    %3 = vector.extract_strided_slice %2 {offsets = [0, 0, 0], sizes = [1, 8, 16], strides = [1, 1, 1]} : vector<1x8x18xf32> to vector<1x8x16xf32>
    %4 = vector.extract_strided_slice %2 {offsets = [0, 0, 2], sizes = [1, 8, 16], strides = [1, 1, 1]} : vector<1x8x18xf32> to vector<1x8x16xf32>
    %5 = arith.addf %3, %4 : vector<1x8x16xf32>
    %cst_2 = arith.constant 2.000000e+00 : f32
    %6 = vector.broadcast %cst_2 : f32 to vector<1x8x16xf32>
    %7 = arith.mulf %6, %0 : vector<1x8x16xf32>
    %8 = arith.subf %5, %7 : vector<1x8x16xf32>
    %cst_3 = arith.constant 0.000000e+00 : f32
    %9 = vector.broadcast %cst_3 : f32 to vector<1x1x16xf32>
    %10 = tpu.concatenate %9, %8, %9 in 1 : vector<1x1x16xf32>, vector<1x8x16xf32>, vector<1x1x16xf32> -> vector<1x10x16xf32>
    %11 = vector.extract_strided_slice %10 {offsets = [0, 0, 0], sizes = [1, 8, 16], strides = [1, 1, 1]} : vector<1x10x16xf32> to vector<1x8x16xf32>
    %12 = vector.extract_strided_slice %10 {offsets = [0, 2, 0], sizes = [1, 8, 16], strides = [1, 1, 1]} : vector<1x10x16xf32> to vector<1x8x16xf32>
    %13 = arith.addf %11, %12 : vector<1x8x16xf32>
    %cst_4 = arith.constant 2.000000e+00 : f32
    %14 = vector.broadcast %cst_4 : f32 to vector<1x8x16xf32>
    %15 = arith.mulf %14, %8 : vector<1x8x16xf32>
    %16 = arith.subf %13, %15 : vector<1x8x16xf32>
    %c0_5 = arith.constant 0 : index
    %c0_6 = arith.constant 0 : index
    %c0_7 = arith.constant 0 : index
    %17 = vector.load %arg2[%c0_5, %c0_6, %c0_7] : memref<1x8x16xf32, #tpu.memory_space<vmem>>, vector<1x8x16xf32>
    tpu.vector_store %arg2[%c0_5, %c0_6, %c0_7], %16 {strides = array<i32>} : memref<1x8x16xf32, #tpu.memory_space<vmem>>, vector<1x8x16xf32>,
    return
  }
  func.func @transform_0(%arg0: i32) -> (i32, i32, i32) {
    %c0_i32 = arith.constant 0 : i32
    %c0_i32_0 = arith.constant 0 : i32
    %c0_i32_1 = arith.constant 0 : i32
    return %arg0, %c0_i32, %c0_i32_0 : i32, i32, i32
  }
  func.func @transform_1(%arg0: i32) -> (i32, i32, i32) {
    %c0_i32 = arith.constant 0 : i32
    %c0_i32_0 = arith.constant 0 : i32
    %c0_i32_1 = arith.constant 0 : i32
    return %arg0, %c0_i32, %c0_i32_0 : i32, i32, i32
  }
}

</mosaic_0001>

<llo_original>
// kernel: tpu_custom_call.1
$region0: #{tpu_custom_call.1}
  #allocation0 [shape = 'u32[]', space=smem, size = 0x4, offset = 0x4, fixed_abs, tag = 'smem constant byte address 0x4 - core index']
  #allocation1 [shape = 'u32[144,128]{1,0:T(1,128)}', space=vmem, size = 0x12000, scoped, tag = 'internal scratch']
  %s0 = inlined_call_operand.hbm [shape: f32[2,8,16], index: 0, kind: input, shape index: {}]
  %s1 = inlined_call_operand.hbm [shape: f32[2,8,16], index: 1, kind: output, shape index: {}]
  %s2 = sld [smem:[#allocation0]]
  $region41: #{tpu_custom_call.1} parent=0
    _
  %s4 = ssub.s32 1, %s2
  %s5 = scalar_select 0, %s4, %s2
  $region1: #{tpu_custom_call.1} parent=0
    #allocation2 [shape = 'u8[8192]{0}', space=vmem, size = 0x2000, scoped, tag = 'input window, operand 0']
    #allocation3 [shape = 's32[2]{0}', space=sflag, size = 0x8, scoped, tag = 'scoped memory for tpu_custom_call.1']
    #allocation4 [shape = 's32[2]{0}', space=sflag, size = 0x8, scoped, tag = 'scoped memory for tpu_custom_call.1']
    #allocation5 [shape = 'u8[8192]{0}', space=vmem, size = 0x2000, scoped, tag = 'output window, operand 0']
    %6 = vsyncpa [#allocation3], 0
    %s7 = scalar_lea.sflag [#allocation3], 1
    %8 = vsyncpa %s7, 0
    %9 = vsyncpa [#allocation4], 0
    %s10 = scalar_lea.sflag [#allocation4], 1
    %11 = vsyncpa %s10, 0
    loop: start=0, step=1, limit=4
    $region2: #{tpu_custom_call.1} parent=1 // loop_pre_header
      _
    $region3: #{tpu_custom_call.1} parent=1 // loop_header
      %s13 = sphi 0, %s17
      %p14 = scmp.ge.s32.totalorder %s13, 4
      %s23 = sphi 0, %s25
      %s26 = sphi 0, %s23
      %s27 = sphi 0, %s26
      %s43 = sphi 0, %s27
      %s49 = sphi 0, %s51
      %s52 = sphi 0, %s49
      %s53 = sphi 0, %s52
      %s69 = sphi 0, %s53
    $region4: #{tpu_custom_call.1} parent=1 // loop_header_branch
      %16 = sbr.rel (%p14) target = $region8
    $region5: #{tpu_custom_call.1} parent=1 // loop_body
      %s18 = ssub.s32 %s13, 1
      %s19 = ssub.s32 %s13, 2
      %s20 = sadd.s32 %s13, 1
      %s21 = ssub.s32 %s13, %s20
      %p22 = scmp.eq.s32.totalorder %s21, 0
      %s24 = sadd.s32 %s23, 1
      %s25 = scalar_select %p22, %s23, %s24
      %p28 = pneg %p22
      %p29 = scmp.eq.s32.totalorder %s13, 1
      %p30 = por %p28, %p29
      %p31 = scmp.ne.s32.totalorder %s23, %s26
      %p32 = scmp.eq.s32.totalorder %s13, 0
      %p33 = por %p31, %p32
      %p34 = scmp.ne.s32.totalorder %s23, %s26
      %p35 = scmp.eq.s32.totalorder %s18, 1
      %p36 = por %p34, %p35
      %p37 = scmp.ne.s32.totalorder %s26, %s27
      %p38 = scmp.eq.s32.totalorder %s18, 0
      %p39 = por %p37, %p38
      %p40 = scmp.ne.s32.totalorder %s26, %s27
      %p41 = scmp.eq.s32.totalorder %s19, 1
      %p42 = por %p40, %p41
      %p44 = scmp.ne.s32.totalorder %s27, %s43
      %p45 = scmp.eq.s32.totalorder %s19, 0
      %p46 = por %p44, %p45
      %s47 = ssub.s32 %s13, %s20
      %p48 = scmp.eq.s32.totalorder %s47, 0
      %s50 = sadd.s32 %s49, 1
      %s51 = scalar_select %p48, %s49, %s50
      %p54 = pneg %p48
      %p55 = scmp.eq.s32.totalorder %s13, 1
      %p56 = por %p54, %p55
      %p57 = scmp.ne.s32.totalorder %s49, %s52
      %p58 = scmp.eq.s32.totalorder %s13, 0
      %p59 = por %p57, %p58
      %p60 = scmp.ne.s32.totalorder %s49, %s52
      %p61 = scmp.eq.s32.totalorder %s18, 1
      %p62 = por %p60, %p61
      %p63 = scmp.ne.s32.totalorder %s52, %s53
      %p64 = scmp.eq.s32.totalorder %s18, 0
      %p65 = por %p63, %p64
      %p66 = scmp.ne.s32.totalorder %s52, %s53
      %p67 = scmp.eq.s32.totalorder %s19, 1
      %p68 = por %p66, %p67
      %p70 = scmp.ne.s32.totalorder %s53, %s69
      %p71 = scmp.eq.s32.totalorder %s19, 0
      %p72 = por %p70, %p71
      %p73 = scmp.le.s32.totalorder 1, %s13
      %p74 = scmp.lt.s32.totalorder %s13, 3
      %p75 = pnand %p73, %p74
      %p76 = pneg %p75
      // Predicated region
      $region9: #{tpu_custom_call.1} parent=5 // pred_check
        _
      $region10: #{tpu_custom_call.1} parent=5 // pred_check_branch
        %78 = sbr.rel (%p75) target = $region12
      $region11: #{tpu_custom_call.1} parent=5 // pred_region
        %s79 = ssub.s32 %s13, 1
      $region12: #{tpu_custom_call.1} parent=5 // pred_fallthru
        _
      %p80 = scmp.lt.s32.totalorder %s13, 2
      // Predicated region
      $region13: #{tpu_custom_call.1} parent=5 // pred_check
        %p81 = pneg %p80
      $region14: #{tpu_custom_call.1} parent=5 // pred_check_branch
        %83 = sbr.rel (%p81) target = $region16
      $region15: #{tpu_custom_call.1} parent=5 // pred_region
        // Predicated region
        $region17: #{tpu_custom_call.1} parent=15 // pred_check
          %p84 = pneg %p33
        $region18: #{tpu_custom_call.1} parent=15 // pred_check_branch
          %86 = sbr.rel (%p84) target = $region20
        $region19: #{tpu_custom_call.1} parent=15 // pred_region
          %s87 = sand.u32 %s23, 1
          %s88 = scalar_lea.sflag [#allocation3], %s87
          %s89 = sand.u32 %s23, 1
          %s90 = smul.addr %s89, 8
          %s91 = scalar_lea.vmem [#allocation2], %s90
          %s93 = ssub.s32 128, 128
          %94 = vsyncadd %s88, %s93
          %s95 = smul.addr %s13, 128
          %s96 = scalar_lea.hbm %s0, %s95
          %s98 = sshll.u32 %s91, 4
          %s99 = int_to_ptr.vmem [resolvable:$true] %s98
          %101 = dma.hbm_to_vmem [thread:$0]  %s96, 128, %s99, %s88
        $region20: #{tpu_custom_call.1} parent=15 // pred_fallthru
          _
      $region16: #{tpu_custom_call.1} parent=5 // pred_fallthru
        _
      %p102 = scmp.le.s32.totalorder 1, %s13
      %p103 = scmp.lt.s32.totalorder %s13, 3
      %p104 = pnand %p102, %p103
      %p105 = pneg %p104
      // Predicated region
      $region21: #{tpu_custom_call.1} parent=5 // pred_check
        _
      $region22: #{tpu_custom_call.1} parent=5 // pred_check_branch
        %107 = sbr.rel (%p104) target = $region24
      $region23: #{tpu_custom_call.1} parent=5 // pred_region
        %s108 = ssub.s32 %s13, 1
        %s109 = sand.u32 %s26, 1
        %s110 = scalar_lea.sflag [#allocation3], %s109
        %s111 = sand.u32 %s26, 1
        %s112 = smul.addr %s111, 8
        %s113 = scalar_lea.vmem [#allocation2], %s112
        // Predicated region
        $region25: #{tpu_custom_call.1} parent=23 // pred_check
          %p114 = pneg %p39
        $region26: #{tpu_custom_call.1} parent=23 // pred_check_branch
          %116 = sbr.rel (%p114) target = $region28
        $region27: #{tpu_custom_call.1} parent=23 // pred_region
          %117 = dma.done %s110, 128
        $region28: #{tpu_custom_call.1} parent=23 // pred_fallthru
          _
        %s118 = sand.u32 %s26, 1
        %s119 = scalar_lea.sflag [#allocation3], %s118
        %s120 = sand.u32 %s26, 1
        %s121 = smul.addr %s120, 8
        %s122 = scalar_lea.vmem [#allocation2], %s121
        %p123 = pneg %p39
        %p124 = pneg %p36
        %p125 = pneg %p65
        %p126 = pneg %p62
        %s127 = sand.u32 %s52, 1
        %s128 = scalar_lea.sflag [#allocation4], %s127
        %s129 = sand.u32 %s52, 1
        %s130 = smul.addr %s129, 8
        %s131 = scalar_lea.vmem [#allocation5], %s130
        %v132 = vld [vmem:[%s113] sm:$0xff]
        %134 = vrot.lane.b32.xlu0 %v132, 1
        %v135 = vpop.permute.xlu0 %134
        %vm137 = vcmask 7168
        %v138 = vsel %vm137, 0.0, %v135
        %vm139 = vcmask 138240
        %v140 = vsel %vm139, %v138, 0.0
        %142 = vrot.lane.b32.xlu0 %v140, 126
        %v143 = vpop.permute.xlu0 %142
        %v145 = vadd.f32 %v140, %v143
        %v146 = vmul.f32 %v132, 2.0
        %v147 = vsub.f32 %v145, %v146
        %v149 = vrot.slane %v147, 7
        %vm151 = vcmask 1040384
        %v152 = vsel %vm151, 0.0, %v149
        %v153 = vsel %vm151, %v149, 0.0
        %vm156 = vcmask 1045504
        %v157 = vrot.slane %v152, 2
        %v158 = vrot.slane %v153, 2
        %v159 = vsel %vm156, %v157, %v158
        %v161 = vadd.f32 %v152, %v159
        %v162 = vmul.f32 %v147, 2.0
        %v163 = vsub.f32 %v161, %v162
        %vm164 = vcmask 130048
        %165 = vst.msk [vmem:[%s131] sm:$0xff] %vm164, %v163
        %s166 = sand.u32 %s52, 1
        %s167 = scalar_lea.sflag [#allocation4], %s166
        %s168 = sand.u32 %s52, 1
        %s169 = smul.addr %s168, 8
        %s170 = scalar_lea.vmem [#allocation5], %s169
        // Predicated region
        $region29: #{tpu_custom_call.1} parent=23 // pred_check
          %p171 = pneg %p62
        $region30: #{tpu_custom_call.1} parent=23 // pred_check_branch
          %173 = sbr.rel (%p171) target = $region32
        $region31: #{tpu_custom_call.1} parent=23 // pred_region
          %s175 = ssub.s32 128, 128
          %176 = vsyncadd %s167, %s175
          %s177 = smul.addr %s18, 128
          %s178 = scalar_lea.hbm %s1, %s177
          %s180 = sshll.u32 %s170, 4
          %s181 = int_to_ptr.vmem [resolvable:$true] %s180
          %183 = dma.vmem_to_hbm [thread:$0]  %s181, 128, %s178, %s167
        $region32: #{tpu_custom_call.1} parent=23 // pred_fallthru
          _
      $region24: #{tpu_custom_call.1} parent=5 // pred_fallthru
        _
      %p184 = scmp.le.s32.totalorder 2, %s13
      // Predicated region
      $region33: #{tpu_custom_call.1} parent=5 // pred_check
        %p185 = pneg %p184
      $region34: #{tpu_custom_call.1} parent=5 // pred_check_branch
        %187 = sbr.rel (%p185) target = $region36
      $region35: #{tpu_custom_call.1} parent=5 // pred_region
        %s188 = ssub.s32 %s13, 2
        // Predicated region
        $region37: #{tpu_custom_call.1} parent=35 // pred_check
          %p189 = pneg %p68
        $region38: #{tpu_custom_call.1} parent=35 // pred_check_branch
          %191 = sbr.rel (%p189) target = $region40
        $region39: #{tpu_custom_call.1} parent=35 // pred_region
          %s192 = sand.u32 %s53, 1
          %s193 = scalar_lea.sflag [#allocation4], %s192
          %s194 = sand.u32 %s53, 1
          %s195 = smul.addr %s194, 8
          %s196 = scalar_lea.vmem [#allocation5], %s195
          %197 = dma.done %s193, 128
        $region40: #{tpu_custom_call.1} parent=35 // pred_fallthru
          _
      $region36: #{tpu_custom_call.1} parent=5 // pred_fallthru
        _
    $region6: #{tpu_custom_call.1} parent=1 // loop_footer
      %s17 = sadd.s32 1, %s13
    $region7: #{tpu_custom_call.1} parent=1 // loop_footer_branch
      %12 = sbr.rel target = $region3
    $region8: #{tpu_custom_call.1} parent=1 // loop_exit
      _
    %198 = vsyncpa [#allocation3], 1
    %s199 = scalar_lea.sflag [#allocation3], 1
    %200 = vsyncpa %s199, 1
    %201 = vsyncpa [#allocation4], 1
    %s202 = scalar_lea.sflag [#allocation4], 1
    %203 = vsyncpa %s202, 1

</llo_original>
